<compile_context>
chip_gen: v5e
topology: v5e:2x2
jax: 0.10.0
libtpu: 0.0.40
codegen_flags: <defaults>
</compile_context>

<pallas_src>
import jax
import jax.numpy as jnp
from jax import lax
from jax.experimental import pallas as pl
from jax.experimental.pallas import tpu as pltpu


# ---------------------------------------------------------------------------
# Fused kernel builder (all shapes / layer configs baked in statically)
# ---------------------------------------------------------------------------
def _make_fused_tcn_kernel(layer_cfgs, L, Bt, C_max, max_pad, compute_dtype):
    BL = Bt * L

    def kernel(*refs):
        x_ref = refs[0]
        o_ref = refs[-2]
        buf_ref = refs[-1]            # (C_max, max_pad + BL) f32 pad scratch
        w_refs = refs[1:-2]

        # Zero the causal-pad margin once per grid step.  (Not gated on
        # program_id==0: with "parallel" megacore sharding each core has its
        # own scratch and may never see grid index 0.)
        if max_pad > 0:
            buf_ref[:, :max_pad] = jnp.zeros((C_max, max_pad), jnp.float32)

        # Per-column time index within its batch segment (hoisted; reused by
        # every tap mask of every layer).
        tmod = lax.broadcasted_iota(jnp.int32, (1, BL), 1) % L

        def causal_conv(act, w_ref, b_ref, C_in, K, dil):
            """Dilated causal conv: act (C_in, BL) f32 -> (C_out, BL) f32."""
            # Stage the activation behind the zero margin so each tap is a
            # plain offset VMEM read (no HBM traffic, no duplicate padded x).
            buf_ref[:C_in, max_pad:] = act
            acc = None
            for j in range(K):                      # static unroll over taps
                s = (K - 1 - j) * dil               # causal right-shift of tap j
                if s >= L:
                    continue                        # tap fully masked out
                tap = buf_ref[:C_in, max_pad - s: max_pad - s + BL]
                if s > 0:
                    # zero positions that would leak across a batch boundary
                    tap = jnp.where(tmod >= s, tap, 0.0)
                d = jnp.dot(w_ref[j], tap.astype(compute_dtype),
                            preferred_element_type=jnp.float32)
                acc = d if acc is None else acc + d
            return acc + b_ref[...]

        act = x_ref[...]                            # (C_in0, BL) f32
        i = 0
        for cfg in layer_cfgs:                      # static unroll over layers
            C_in, K, dil = cfg["C_in"], cfg["K"], cfg["dilation"]
            w1, b1, w2, b2 = w_refs[i], w_refs[i + 1], w_refs[i + 2], w_refs[i + 3]
            i += 4
            # conv1 -> chomp -> ReLU -> dropout (eval-mode identity)
            h = jnp.maximum(causal_conv(act, w1, b1, C_in, K, dil), 0.0)
            # conv2 -> chomp -> ReLU -> dropout (eval-mode identity)
            out = jnp.maximum(causal_conv(h, w2, b2, cfg["C_out"], K, dil), 0.0)
            # residual (1x1 downsample iff C_in != C_out) + final ReLU
            if cfg["has_ds"]:
                wd, bd = w_refs[i], w_refs[i + 1]
                i += 2
                res = jnp.dot(wd[...], act.astype(compute_dtype),
                              preferred_element_type=jnp.float32) + bd[...]
            else:
                res = act
            act = jnp.maximum(out + res, 0.0)

        o_ref[...] = act.astype(o_ref.dtype)

    return kernel


# ---------------------------------------------------------------------------
# Wrapper: one pallas_call for the whole stack, lane-dense (C, B*L) layout
# ---------------------------------------------------------------------------
def _pick_batch_tile(B, L, target_lanes=8192):
    """Batches per grid step: large lane dim, whole-batch tiles, (…,128)-safe."""
    if B * L <= target_lanes:
        return B                                   # single full-width block
    for bt in range(B, 0, -1):
        if B % bt == 0 and bt * L <= target_lanes and (bt * L) % 128 == 0:
            return bt
    return B                                       # fallback: one big block


def prepare_tcn_params(params, compute_dtype=jnp.float32):
    """One-time weight re-layout (hoisted out of the forward): tap-major
    weight stacks, column biases, optional bf16 cast of matmul operands."""
    prepped = []
    for i, p in enumerate(params):
        w1, w2 = p["w1"], p["w2"]                  # (C_out,C_in,K), (C_out,C_out,K)
        c_out, c_in, K = w1.shape
        lp = {
            "C_in": c_in, "C_out": c_out, "K": K, "dilation": 2 ** i,
            "has_ds": p["wd"] is not None,
            "w1": jnp.transpose(w1, (2, 0, 1)).astype(compute_dtype),  # (K,C_out,C_in)
            "b1": p["b1"].reshape(c_out, 1).astype(jnp.float32),
            "w2": jnp.transpose(w2, (2, 0, 1)).astype(compute_dtype),  # (K,C_out,C_out)
            "b2": p["b2"].reshape(c_out, 1).astype(jnp.float32),
        }
        if lp["has_ds"]:
            lp["wd"] = p["wd"].reshape(c_out, c_in).astype(compute_dtype)
            lp["bd"] = p["bd"].reshape(c_out, 1).astype(jnp.float32)
        prepped.append(lp)
    return prepped


def temporal_conv_net(x, prepped):
    """Fused TCN forward.  x: (B, C_in, L) f32 -> (B, C_out_last, L) f32."""
    B, C_in0, L = x.shape
    C_last = prepped[-1]["C_out"]
    compute_dtype = prepped[0]["w1"].dtype

    Bt = _pick_batch_tile(B, L)
    grid = (B // Bt,)
    BL_tile = Bt * L

    # Lane-dense activation slab: (B, C, L) -> (C, B*L)  (layout plumbing).
    x2 = jnp.transpose(x, (1, 0, 2)).reshape(C_in0, B * L)

    def _const_spec(a):
        zero = (0,) * a.ndim
        return pl.BlockSpec(a.shape, lambda i, z=zero: z)

    in_specs = [pl.BlockSpec((C_in0, BL_tile), lambda i: (0, i))]
    args = [x2]
    layer_cfgs = []
    C_max, max_pad = C_in0, 0
    for lp in prepped:
        cfg = {k: lp[k] for k in ("C_in", "C_out", "K", "dilation", "has_ds")}
        layer_cfgs.append(cfg)
        C_max = max(C_max, cfg["C_in"], cfg["C_out"])
        max_pad = max(max_pad, (cfg["K"] - 1) * cfg["dilation"])
        names = ["w1", "b1", "w2", "b2"] + (["wd", "bd"] if cfg["has_ds"] else [])
        for n in names:
            in_specs.append(_const_spec(lp[n]))
            args.append(lp[n])

    kernel = _make_fused_tcn_kernel(layer_cfgs, L, Bt, C_max, max_pad,
                                    compute_dtype)

    out2 = pl.pallas_call(
        kernel,
        out_shape=jax.ShapeDtypeStruct((C_last, B * L), jnp.float32),
        grid_spec=pltpu.PrefetchScalarGridSpec(
            num_scalar_prefetch=0,
            grid=grid,
            in_specs=in_specs,
            out_specs=pl.BlockSpec((C_last, BL_tile), lambda i: (0, i)),
            scratch_shapes=[pltpu.VMEM((C_max, max_pad + BL_tile), jnp.float32)],
        ),
        compiler_params=pltpu.CompilerParams(
            dimension_semantics=("parallel",)),
    )(*args)

    return jnp.transpose(out2.reshape(C_last, B, L), (1, 0, 2))


# ---------------------------------------------------------------------------
# Deterministic parameter init (mirrors module __init__ shapes + weight_norm)
# ---------------------------------------------------------------------------
def init_tcn_params(key, num_inputs, num_channels, kernel_size):
    def weight_norm_w(v):
        # weight_norm(dim=0): w = g * v / ||v||, with g initialized to ||v||.
        norm = jnp.sqrt(jnp.sum(v * v, axis=(1, 2), keepdims=True))
        return norm * v / norm

    params = []
    for i, c_out in enumerate(num_channels):
        c_in = num_inputs if i == 0 else num_channels[i - 1]
        key, k1, k2, k3, k4, k5, k6 = jax.random.split(key, 7)
        v1 = 0.01 * jax.random.normal(k1, (c_out, c_in, kernel_size), jnp.float32)
        v2 = 0.01 * jax.random.normal(k3, (c_out, c_out, kernel_size), jnp.float32)
        p = {
            "w1": weight_norm_w(v1),
            "b1": 0.1 * jax.random.normal(k2, (c_out,), jnp.float32),
            "w2": weight_norm_w(v2),
            "b2": 0.1 * jax.random.normal(k4, (c_out,), jnp.float32),
        }
        if c_in != c_out:
            p["wd"] = 0.01 * jax.random.normal(k5, (c_out, c_in, 1), jnp.float32)
            p["bd"] = 0.1 * jax.random.normal(k6, (c_out,), jnp.float32)
        else:
            p["wd"] = None
            p["bd"] = None
        params.append(p)
    return params


# ---------------------------------------------------------------------------
# Pure-JAX reference (for correctness check only)
# ---------------------------------------------------------------------------
def _ref_block(x, w1, b1, w2, b2, wd, bd, dilation, K):
    pad = (K - 1) * dilation

    def causal_conv(x, w, b):
        xpad = jnp.pad(x, ((0, 0), (0, 0), (pad, 0)))
        L = x.shape[-1]
        y = jnp.zeros((x.shape[0], w.shape[0], L), jnp.float32)
        for j in range(K):
            y = y + jnp.einsum("oc,bcl->bol", w[:, :, j],
                               xpad[:, :, j * dilation: j * dilation + L])
        return y + b[None, :, None]

    h = jax.nn.relu(causal_conv(x, w1, b1))
    out = jax.nn.relu(causal_conv(h, w2, b2))
    if wd is None:
        res = x
    else:
        res = jnp.einsum("oc,bcl->bol", wd[:, :, 0], x) + bd[None, :, None]
    return jax.nn.relu(out + res)


def _ref_tcn(x, params, kernel_size):
    for i, p in enumerate(params):
        x = _ref_block(x, p["w1"], p["b1"], p["w2"], p["b2"], p["wd"], p["bd"],
                       dilation=2 ** i, K=kernel_size)
    return x


# ---------------------------------------------------------------------------
if __name__ == "__main__":
    key = jax.random.PRNGKey(0)
    k_x, k_p = jax.random.split(key)

    # TemporalConvNet(num_inputs=4, num_channels=[8, 8], kernel_size=2)
    B, num_inputs, L = 2, 4, 16
    num_channels = [8, 8]
    kernel_size = 2

    x = jax.random.normal(k_x, (B, num_inputs, L), jnp.float32)
    params = init_tcn_params(k_p, num_inputs, num_channels, kernel_size)
    ref = jax.block_until_ready(_ref_tcn(x, params, kernel_size))

    # f32 MXU path: validate tightly against the pure-JAX reference.
    prepped_f32 = prepare_tcn_params(params, compute_dtype=jnp.float32)
    out = jax.block_until_ready(temporal_conv_net(x, prepped_f32))
    assert out.shape == (B, num_channels[-1], L)
    assert jnp.allclose(out, ref, atol=1e-5, rtol=1e-5), "f32 mismatch vs reference"

    # bf16 MXU path (v6e/v7x throughput; f32 accumulation): looser tolerance.
    prepped_bf16 = prepare_tcn_params(params, compute_dtype=jnp.bfloat16)
    out_bf16 = jax.block_until_ready(temporal_conv_net(x, prepped_bf16))
    assert out_bf16.shape == (B, num_channels[-1], L)
    assert jnp.allclose(out_bf16, ref, atol=2e-2, rtol=2e-2), "bf16 mismatch vs reference"

    print("KERNEL_OK")
</pallas_src>

<mosaic_0001>
module attributes {stable_mosaic.version = 11 : i64} {
  func.func @kernel(%arg0: i32, %arg1: memref<4x32xf32, #tpu.memory_space<vmem>>, %arg2: memref<2x8x4xf32, #tpu.memory_space<vmem>>, %arg3: memref<8x1xf32, #tpu.memory_space<vmem>>, %arg4: memref<2x8x8xf32, #tpu.memory_space<vmem>>, %arg5: memref<8x1xf32, #tpu.memory_space<vmem>>, %arg6: memref<8x4xf32, #tpu.memory_space<vmem>>, %arg7: memref<8x1xf32, #tpu.memory_space<vmem>>, %arg8: memref<2x8x8xf32, #tpu.memory_space<vmem>>, %arg9: memref<8x1xf32, #tpu.memory_space<vmem>>, %arg10: memref<2x8x8xf32, #tpu.memory_space<vmem>>, %arg11: memref<8x1xf32, #tpu.memory_space<vmem>>, %arg12: memref<8x32xf32, #tpu.memory_space<vmem>>, %arg13: memref<8x34xf32, #tpu.memory_space<vmem>>) attributes {dimension_semantics = [#tpu.dimension_semantics<parallel>], iteration_bounds = array<i64: 1>, scalar_prefetch = 0 : i64, scratch_operands = 1 : i64, tpu.core_type = #tpu.core_type<tc>, window_params = [{transform_indices = @transform_0, window_bounds = array<i64: 4, 32>}, {pipeline_mode = #tpu.pipeline_mode<synchronous>, transform_indices = @transform_1, window_bounds = array<i64: 2, 8, 4>}, {pipeline_mode = #tpu.pipeline_mode<synchronous>, transform_indices = @transform_2, window_bounds = array<i64: 8, 1>}, {pipeline_mode = #tpu.pipeline_mode<synchronous>, transform_indices = @transform_3, window_bounds = array<i64: 2, 8, 8>}, {pipeline_mode = #tpu.pipeline_mode<synchronous>, transform_indices = @transform_4, window_bounds = array<i64: 8, 1>}, {pipeline_mode = #tpu.pipeline_mode<synchronous>, transform_indices = @transform_5, window_bounds = array<i64: 8, 4>}, {pipeline_mode = #tpu.pipeline_mode<synchronous>, transform_indices = @transform_6, window_bounds = array<i64: 8, 1>}, {pipeline_mode = #tpu.pipeline_mode<synchronous>, transform_indices = @transform_7, window_bounds = array<i64: 2, 8, 8>}, {pipeline_mode = #tpu.pipeline_mode<synchronous>, transform_indices = @transform_8, window_bounds = array<i64: 8, 1>}, {pipeline_mode = #tpu.pipeline_mode<synchronous>, transform_indices = @transform_9, window_bounds = array<i64: 2, 8, 8>}, {pipeline_mode = #tpu.pipeline_mode<synchronous>, transform_indices = @transform_10, window_bounds = array<i64: 8, 1>}, {transform_indices = @transform_11, window_bounds = array<i64: 8, 32>}]} {
    %cst = arith.constant 0.000000e+00 : f32
    %0 = vector.broadcast %cst : f32 to vector<8x2xf32>
    %c0 = arith.constant 0 : index
    %c0_0 = arith.constant 0 : index
    %1 = vector.load %arg13[%c0, %c0_0] : memref<8x34xf32, #tpu.memory_space<vmem>>, vector<8x2xf32>
    tpu.vector_store %arg13[%c0, %c0_0], %0 {strides = array<i32>} : memref<8x34xf32, #tpu.memory_space<vmem>>, vector<8x2xf32>,
    %2 = tpu.iota {dimensions = array<i32: 1>} : vector<1x32xi32>
    %c16_i32 = arith.constant 16 : i32
    %c0_i32 = arith.constant 0 : i32
    %3 = arith.cmpi eq, %c16_i32, %c0_i32 : i32
    %c1_i32 = arith.constant 1 : i32
    %4 = arith.select %3, %c1_i32, %c16_i32 : i32
    %5 = vector.broadcast %4 : i32 to vector<1x32xi32>
    %6 = arith.remsi %2, %5 : vector<1x32xi32>
    %c0_i32_1 = arith.constant 0 : i32
    %7 = vector.broadcast %c0_i32_1 : i32 to vector<1x32xi32>
    %8 = arith.cmpi ne, %6, %7 : vector<1x32xi32>
    %c0_i32_2 = arith.constant 0 : i32
    %9 = vector.broadcast %c0_i32_2 : i32 to vector<1x32xi32>
    %10 = arith.cmpi slt, %6, %9 : vector<1x32xi32>
    %c0_i32_3 = arith.constant 0 : i32
    %11 = arith.cmpi slt, %4, %c0_i32_3 : i32
    %12 = vector.broadcast %11 : i1 to vector<1x32xi1>
    %13 = vector.broadcast %12 : vector<1x32xi1> to vector<1x32xi1>
    %14 = arith.xori %10, %13 : vector<1x32xi1>
    %15 = arith.andi %14, %8 : vector<1x32xi1>
    %16 = vector.broadcast %4 : i32 to vector<1x32xi32>
    %17 = arith.addi %6, %16 : vector<1x32xi32>
    %18 = arith.select %15, %17, %6 : vector<1x32xi1>, vector<1x32xi32>
    %c0_4 = arith.constant 0 : index
    %c0_5 = arith.constant 0 : index
    %19 = vector.load %arg1[%c0_4, %c0_5] : memref<4x32xf32, #tpu.memory_space<vmem>>, vector<4x32xf32>
    %c0_6 = arith.constant 0 : index
    %c2 = arith.constant 2 : index
    %20 = vector.load %arg13[%c0_6, %c2] : memref<8x34xf32, #tpu.memory_space<vmem>>, vector<4x32xf32>
    tpu.vector_store %arg13[%c0_6, %c2], %19 {strides = array<i32>} : memref<8x34xf32, #tpu.memory_space<vmem>>, vector<4x32xf32>,
    %c0_7 = arith.constant 0 : index
    %c1 = arith.constant 1 : index
    %21 = vector.load %arg13[%c0_7, %c1] : memref<8x34xf32, #tpu.memory_space<vmem>>, vector<4x32xf32>
    %c1_i32_8 = arith.constant 1 : i32
    %22 = vector.broadcast %c1_i32_8 : i32 to vector<1x32xi32>
    %23 = arith.cmpi sge, %18, %22 : vector<1x32xi32>
    %cst_9 = arith.constant 0.000000e+00 : f32
    %24 = vector.shape_cast %23 : vector<1x32xi1> to vector<1x32xi1>
    %25 = vector.broadcast %24 : vector<1x32xi1> to vector<4x32xi1>
    %26 = vector.broadcast %cst_9 : f32 to vector<4x32xf32>
    %27 = arith.select %25, %21, %26 : vector<4x32xi1>, vector<4x32xf32>
    %c0_10 = arith.constant 0 : index
    %c0_11 = arith.constant 0 : index
    %c0_12 = arith.constant 0 : index
    %28 = vector.load %arg2[%c0_10, %c0_11, %c0_12] : memref<2x8x4xf32, #tpu.memory_space<vmem>>, vector<1x8x4xf32>
    %29 = vector.shape_cast %28 : vector<1x8x4xf32> to vector<8x4xf32>
    %cst_13 = arith.constant dense<0.000000e+00> : vector<8x32xf32>
    %30 = tpu.matmul %29, %27, %cst_13 {dimension_numbers = #tpu.dot_dimension_numbers<[1], [0], [0], [1], [0, 0, 1, 1], [], []>} : vector<8x4xf32>, vector<4x32xf32>, vector<8x32xf32> -> vector<8x32xf32>
    %c0_14 = arith.constant 0 : index
    %c2_15 = arith.constant 2 : index
    %31 = vector.load %arg13[%c0_14, %c2_15] : memref<8x34xf32, #tpu.memory_space<vmem>>, vector<4x32xf32>
    %c1_16 = arith.constant 1 : index
    %c0_17 = arith.constant 0 : index
    %c0_18 = arith.constant 0 : index
    %32 = vector.load %arg2[%c1_16, %c0_17, %c0_18] : memref<2x8x4xf32, #tpu.memory_space<vmem>>, vector<1x8x4xf32>
    %33 = vector.shape_cast %32 : vector<1x8x4xf32> to vector<8x4xf32>
    %cst_19 = arith.constant dense<0.000000e+00> : vector<8x32xf32>
    %34 = tpu.matmul %33, %31, %cst_19 {dimension_numbers = #tpu.dot_dimension_numbers<[1], [0], [0], [1], [0, 0, 1, 1], [], []>} : vector<8x4xf32>, vector<4x32xf32>, vector<8x32xf32> -> vector<8x32xf32>
    %35 = arith.addf %30, %34 : vector<8x32xf32>
    %c0_20 = arith.constant 0 : index
    %c0_21 = arith.constant 0 : index
    %36 = vector.load %arg3[%c0_20, %c0_21] : memref<8x1xf32, #tpu.memory_space<vmem>>, vector<8x1xf32>
    %37 = vector.broadcast %36 : vector<8x1xf32> to vector<8x32xf32>
    %38 = arith.addf %35, %37 : vector<8x32xf32>
    %cst_22 = arith.constant 0.000000e+00 : f32
    %39 = vector.broadcast %cst_22 : f32 to vector<8x32xf32>
    %40 = arith.maximumf %38, %39 : vector<8x32xf32>
    %c0_23 = arith.constant 0 : index
    %c2_24 = arith.constant 2 : index
    %41 = vector.load %arg13[%c0_23, %c2_24] : memref<8x34xf32, #tpu.memory_space<vmem>>, vector<8x32xf32>
    tpu.vector_store %arg13[%c0_23, %c2_24], %40 {strides = array<i32>} : memref<8x34xf32, #tpu.memory_space<vmem>>, vector<8x32xf32>,
    %c0_25 = arith.constant 0 : index
    %c1_26 = arith.constant 1 : index
    %42 = vector.load %arg13[%c0_25, %c1_26] : memref<8x34xf32, #tpu.memory_space<vmem>>, vector<8x32xf32>
    %c1_i32_27 = arith.constant 1 : i32
    %43 = vector.broadcast %c1_i32_27 : i32 to vector<1x32xi32>
    %44 = arith.cmpi sge, %18, %43 : vector<1x32xi32>
    %cst_28 = arith.constant 0.000000e+00 : f32
    %45 = vector.shape_cast %44 : vector<1x32xi1> to vector<1x32xi1>
    %46 = vector.broadcast %45 : vector<1x32xi1> to vector<8x32xi1>
    %47 = vector.broadcast %cst_28 : f32 to vector<8x32xf32>
    %48 = arith.select %46, %42, %47 : vector<8x32xi1>, vector<8x32xf32>
    %c0_29 = arith.constant 0 : index
    %c0_30 = arith.constant 0 : index
    %c0_31 = arith.constant 0 : index
    %49 = vector.load %arg4[%c0_29, %c0_30, %c0_31] : memref<2x8x8xf32, #tpu.memory_space<vmem>>, vector<1x8x8xf32>
    %50 = vector.shape_cast %49 : vector<1x8x8xf32> to vector<8x8xf32>
    %cst_32 = arith.constant dense<0.000000e+00> : vector<8x32xf32>
    %51 = tpu.matmul %50, %48, %cst_32 {dimension_numbers = #tpu.dot_dimension_numbers<[1], [0], [0], [1], [0, 0, 1, 1], [], []>} : vector<8x8xf32>, vector<8x32xf32>, vector<8x32xf32> -> vector<8x32xf32>
    %c0_33 = arith.constant 0 : index
    %c2_34 = arith.constant 2 : index
    %52 = vector.load %arg13[%c0_33, %c2_34] : memref<8x34xf32, #tpu.memory_space<vmem>>, vector<8x32xf32>
    %c1_35 = arith.constant 1 : index
    %c0_36 = arith.constant 0 : index
    %c0_37 = arith.constant 0 : index
    %53 = vector.load %arg4[%c1_35, %c0_36, %c0_37] : memref<2x8x8xf32, #tpu.memory_space<vmem>>, vector<1x8x8xf32>
    %54 = vector.shape_cast %53 : vector<1x8x8xf32> to vector<8x8xf32>
    %cst_38 = arith.constant dense<0.000000e+00> : vector<8x32xf32>
    %55 = tpu.matmul %54, %52, %cst_38 {dimension_numbers = #tpu.dot_dimension_numbers<[1], [0], [0], [1], [0, 0, 1, 1], [], []>} : vector<8x8xf32>, vector<8x32xf32>, vector<8x32xf32> -> vector<8x32xf32>
    %56 = arith.addf %51, %55 : vector<8x32xf32>
    %c0_39 = arith.constant 0 : index
    %c0_40 = arith.constant 0 : index
    %57 = vector.load %arg5[%c0_39, %c0_40] : memref<8x1xf32, #tpu.memory_space<vmem>>, vector<8x1xf32>
    %58 = vector.broadcast %57 : vector<8x1xf32> to vector<8x32xf32>
    %59 = arith.addf %56, %58 : vector<8x32xf32>
    %cst_41 = arith.constant 0.000000e+00 : f32
    %60 = vector.broadcast %cst_41 : f32 to vector<8x32xf32>
    %61 = arith.maximumf %59, %60 : vector<8x32xf32>
    %c0_42 = arith.constant 0 : index
    %c0_43 = arith.constant 0 : index
    %62 = vector.load %arg6[%c0_42, %c0_43] : memref<8x4xf32, #tpu.memory_space<vmem>>, vector<8x4xf32>
    %cst_44 = arith.constant dense<0.000000e+00> : vector<8x32xf32>
    %63 = tpu.matmul %62, %19, %cst_44 {dimension_numbers = #tpu.dot_dimension_numbers<[1], [0], [0], [1], [0, 0, 1, 1], [], []>} : vector<8x4xf32>, vector<4x32xf32>, vector<8x32xf32> -> vector<8x32xf32>
    %c0_45 = arith.constant 0 : index
    %c0_46 = arith.constant 0 : index
    %64 = vector.load %arg7[%c0_45, %c0_46] : memref<8x1xf32, #tpu.memory_space<vmem>>, vector<8x1xf32>
    %65 = vector.broadcast %64 : vector<8x1xf32> to vector<8x32xf32>
    %66 = arith.addf %63, %65 : vector<8x32xf32>
    %67 = arith.addf %61, %66 : vector<8x32xf32>
    %cst_47 = arith.constant 0.000000e+00 : f32
    %68 = vector.broadcast %cst_47 : f32 to vector<8x32xf32>
    %69 = arith.maximumf %67, %68 : vector<8x32xf32>
    %c0_48 = arith.constant 0 : index
    %c2_49 = arith.constant 2 : index
    %70 = vector.load %arg13[%c0_48, %c2_49] : memref<8x34xf32, #tpu.memory_space<vmem>>, vector<8x32xf32>
    tpu.vector_store %arg13[%c0_48, %c2_49], %69 {strides = array<i32>} : memref<8x34xf32, #tpu.memory_space<vmem>>, vector<8x32xf32>,
    %c0_50 = arith.constant 0 : index
    %c0_51 = arith.constant 0 : index
    %71 = vector.load %arg13[%c0_50, %c0_51] : memref<8x34xf32, #tpu.memory_space<vmem>>, vector<8x32xf32>
    %c2_i32 = arith.constant 2 : i32
    %72 = vector.broadcast %c2_i32 : i32 to vector<1x32xi32>
    %73 = arith.cmpi sge, %18, %72 : vector<1x32xi32>
    %cst_52 = arith.constant 0.000000e+00 : f32
    %74 = vector.shape_cast %73 : vector<1x32xi1> to vector<1x32xi1>
    %75 = vector.broadcast %74 : vector<1x32xi1> to vector<8x32xi1>
    %76 = vector.broadcast %cst_52 : f32 to vector<8x32xf32>
    %77 = arith.select %75, %71, %76 : vector<8x32xi1>, vector<8x32xf32>
    %c0_53 = arith.constant 0 : index
    %c0_54 = arith.constant 0 : index
    %c0_55 = arith.constant 0 : index
    %78 = vector.load %arg8[%c0_53, %c0_54, %c0_55] : memref<2x8x8xf32, #tpu.memory_space<vmem>>, vector<1x8x8xf32>
    %79 = vector.shape_cast %78 : vector<1x8x8xf32> to vector<8x8xf32>
    %cst_56 = arith.constant dense<0.000000e+00> : vector<8x32xf32>
    %80 = tpu.matmul %79, %77, %cst_56 {dimension_numbers = #tpu.dot_dimension_numbers<[1], [0], [0], [1], [0, 0, 1, 1], [], []>} : vector<8x8xf32>, vector<8x32xf32>, vector<8x32xf32> -> vector<8x32xf32>
    %c0_57 = arith.constant 0 : index
    %c2_58 = arith.constant 2 : index
    %81 = vector.load %arg13[%c0_57, %c2_58] : memref<8x34xf32, #tpu.memory_space<vmem>>, vector<8x32xf32>
    %c1_59 = arith.constant 1 : index
    %c0_60 = arith.constant 0 : index
    %c0_61 = arith.constant 0 : index
    %82 = vector.load %arg8[%c1_59, %c0_60, %c0_61] : memref<2x8x8xf32, #tpu.memory_space<vmem>>, vector<1x8x8xf32>
    %83 = vector.shape_cast %82 : vector<1x8x8xf32> to vector<8x8xf32>
    %cst_62 = arith.constant dense<0.000000e+00> : vector<8x32xf32>
    %84 = tpu.matmul %83, %81, %cst_62 {dimension_numbers = #tpu.dot_dimension_numbers<[1], [0], [0], [1], [0, 0, 1, 1], [], []>} : vector<8x8xf32>, vector<8x32xf32>, vector<8x32xf32> -> vector<8x32xf32>
    %85 = arith.addf %80, %84 : vector<8x32xf32>
    %c0_63 = arith.constant 0 : index
    %c0_64 = arith.constant 0 : index
    %86 = vector.load %arg9[%c0_63, %c0_64] : memref<8x1xf32, #tpu.memory_space<vmem>>, vector<8x1xf32>
    %87 = vector.broadcast %86 : vector<8x1xf32> to vector<8x32xf32>
    %88 = arith.addf %85, %87 : vector<8x32xf32>
    %cst_65 = arith.constant 0.000000e+00 : f32
    %89 = vector.broadcast %cst_65 : f32 to vector<8x32xf32>
    %90 = arith.maximumf %88, %89 : vector<8x32xf32>
    %c0_66 = arith.constant 0 : index
    %c2_67 = arith.constant 2 : index
    %91 = vector.load %arg13[%c0_66, %c2_67] : memref<8x34xf32, #tpu.memory_space<vmem>>, vector<8x32xf32>
    tpu.vector_store %arg13[%c0_66, %c2_67], %90 {strides = array<i32>} : memref<8x34xf32, #tpu.memory_space<vmem>>, vector<8x32xf32>,
    %c0_68 = arith.constant 0 : index
    %c0_69 = arith.constant 0 : index
    %92 = vector.load %arg13[%c0_68, %c0_69] : memref<8x34xf32, #tpu.memory_space<vmem>>, vector<8x32xf32>
    %c2_i32_70 = arith.constant 2 : i32
    %93 = vector.broadcast %c2_i32_70 : i32 to vector<1x32xi32>
    %94 = arith.cmpi sge, %18, %93 : vector<1x32xi32>
    %cst_71 = arith.constant 0.000000e+00 : f32
    %95 = vector.shape_cast %94 : vector<1x32xi1> to vector<1x32xi1>
    %96 = vector.broadcast %95 : vector<1x32xi1> to vector<8x32xi1>
    %97 = vector.broadcast %cst_71 : f32 to vector<8x32xf32>
    %98 = arith.select %96, %92, %97 : vector<8x32xi1>, vector<8x32xf32>
    %c0_72 = arith.constant 0 : index
    %c0_73 = arith.constant 0 : index
    %c0_74 = arith.constant 0 : index
    %99 = vector.load %arg10[%c0_72, %c0_73, %c0_74] : memref<2x8x8xf32, #tpu.memory_space<vmem>>, vector<1x8x8xf32>
    %100 = vector.shape_cast %99 : vector<1x8x8xf32> to vector<8x8xf32>
    %cst_75 = arith.constant dense<0.000000e+00> : vector<8x32xf32>
    %101 = tpu.matmul %100, %98, %cst_75 {dimension_numbers = #tpu.dot_dimension_numbers<[1], [0], [0], [1], [0, 0, 1, 1], [], []>} : vector<8x8xf32>, vector<8x32xf32>, vector<8x32xf32> -> vector<8x32xf32>
    %c0_76 = arith.constant 0 : index
    %c2_77 = arith.constant 2 : index
    %102 = vector.load %arg13[%c0_76, %c2_77] : memref<8x34xf32, #tpu.memory_space<vmem>>, vector<8x32xf32>
    %c1_78 = arith.constant 1 : index
    %c0_79 = arith.constant 0 : index
    %c0_80 = arith.constant 0 : index
    %103 = vector.load %arg10[%c1_78, %c0_79, %c0_80] : memref<2x8x8xf32, #tpu.memory_space<vmem>>, vector<1x8x8xf32>
    %104 = vector.shape_cast %103 : vector<1x8x8xf32> to vector<8x8xf32>
    %cst_81 = arith.constant dense<0.000000e+00> : vector<8x32xf32>
    %105 = tpu.matmul %104, %102, %cst_81 {dimension_numbers = #tpu.dot_dimension_numbers<[1], [0], [0], [1], [0, 0, 1, 1], [], []>} : vector<8x8xf32>, vector<8x32xf32>, vector<8x32xf32> -> vector<8x32xf32>
    %106 = arith.addf %101, %105 : vector<8x32xf32>
    %c0_82 = arith.constant 0 : index
    %c0_83 = arith.constant 0 : index
    %107 = vector.load %arg11[%c0_82, %c0_83] : memref<8x1xf32, #tpu.memory_space<vmem>>, vector<8x1xf32>
    %108 = vector.broadcast %107 : vector<8x1xf32> to vector<8x32xf32>
    %109 = arith.addf %106, %108 : vector<8x32xf32>
    %cst_84 = arith.constant 0.000000e+00 : f32
    %110 = vector.broadcast %cst_84 : f32 to vector<8x32xf32>
    %111 = arith.maximumf %109, %110 : vector<8x32xf32>
    %112 = arith.addf %111, %69 : vector<8x32xf32>
    %cst_85 = arith.constant 0.000000e+00 : f32
    %113 = vector.broadcast %cst_85 : f32 to vector<8x32xf32>
    %114 = arith.maximumf %112, %113 : vector<8x32xf32>
    %c0_86 = arith.constant 0 : index
    %c0_87 = arith.constant 0 : index
    %115 = vector.load %arg12[%c0_86, %c0_87] : memref<8x32xf32, #tpu.memory_space<vmem>>, vector<8x32xf32>
    tpu.vector_store %arg12[%c0_86, %c0_87], %114 {strides = array<i32>} : memref<8x32xf32, #tpu.memory_space<vmem>>, vector<8x32xf32>,
    return
  }
  func.func @transform_0(%arg0: i32) -> (i32, i32) {
    %c0_i32 = arith.constant 0 : i32
    %c0_i32_0 = arith.constant 0 : i32
    return %c0_i32, %arg0 : i32, i32
  }
  func.func @transform_1(%arg0: i32) -> (i32, i32, i32) {
    %c0_i32 = arith.constant 0 : i32
    %c0_i32_0 = arith.constant 0 : i32
    %c0_i32_1 = arith.constant 0 : i32
    %c0_i32_2 = arith.constant 0 : i32
    return %c0_i32, %c0_i32_0, %c0_i32_1 : i32, i32, i32
  }
  func.func @transform_2(%arg0: i32) -> (i32, i32) {
    %c0_i32 = arith.constant 0 : i32
    %c0_i32_0 = arith.constant 0 : i32
    %c0_i32_1 = arith.constant 0 : i32
    return %c0_i32, %c0_i32_0 : i32, i32
  }
  func.func @transform_3(%arg0: i32) -> (i32, i32, i32) {
    %c0_i32 = arith.constant 0 : i32
    %c0_i32_0 = arith.constant 0 : i32
    %c0_i32_1 = arith.constant 0 : i32
    %c0_i32_2 = arith.constant 0 : i32
    return %c0_i32, %c0_i32_0, %c0_i32_1 : i32, i32, i32
  }
  func.func @transform_4(%arg0: i32) -> (i32, i32) {
    %c0_i32 = arith.constant 0 : i32
    %c0_i32_0 = arith.constant 0 : i32
    %c0_i32_1 = arith.constant 0 : i32
    return %c0_i32, %c0_i32_0 : i32, i32
  }
  func.func @transform_5(%arg0: i32) -> (i32, i32) {
    %c0_i32 = arith.constant 0 : i32
    %c0_i32_0 = arith.constant 0 : i32
    %c0_i32_1 = arith.constant 0 : i32
    return %c0_i32, %c0_i32_0 : i32, i32
  }
  func.func @transform_6(%arg0: i32) -> (i32, i32) {
    %c0_i32 = arith.constant 0 : i32
    %c0_i32_0 = arith.constant 0 : i32
    %c0_i32_1 = arith.constant 0 : i32
    return %c0_i32, %c0_i32_0 : i32, i32
  }
  func.func @transform_7(%arg0: i32) -> (i32, i32, i32) {
    %c0_i32 = arith.constant 0 : i32
    %c0_i32_0 = arith.constant 0 : i32
    %c0_i32_1 = arith.constant 0 : i32
    %c0_i32_2 = arith.constant 0 : i32
    return %c0_i32, %c0_i32_0, %c0_i32_1 : i32, i32, i32
  }
  func.func @transform_8(%arg0: i32) -> (i32, i32) {
    %c0_i32 = arith.constant 0 : i32
    %c0_i32_0 = arith.constant 0 : i32
    %c0_i32_1 = arith.constant 0 : i32
    return %c0_i32, %c0_i32_0 : i32, i32
  }
  func.func @transform_9(%arg0: i32) -> (i32, i32, i32) {
    %c0_i32 = arith.constant 0 : i32
    %c0_i32_0 = arith.constant 0 : i32
    %c0_i32_1 = arith.constant 0 : i32
    %c0_i32_2 = arith.constant 0 : i32
    return %c0_i32, %c0_i32_0, %c0_i32_1 : i32, i32, i32
  }
  func.func @transform_10(%arg0: i32) -> (i32, i32) {
    %c0_i32 = arith.constant 0 : i32
    %c0_i32_0 = arith.constant 0 : i32
    %c0_i32_1 = arith.constant 0 : i32
    return %c0_i32, %c0_i32_0 : i32, i32
  }
  func.func @transform_11(%arg0: i32) -> (i32, i32) {
    %c0_i32 = arith.constant 0 : i32
    %c0_i32_0 = arith.constant 0 : i32
    return %c0_i32, %arg0 : i32, i32
  }
}

</mosaic_0001>

<llo_original>
// kernel: tpu_custom_call.1
$region0: #{tpu_custom_call.1}
  #allocation0 [shape = 'u32[]', space=smem, size = 0x4, offset = 0x4, fixed_abs, tag = 'smem constant byte address 0x4 - core index']
  #allocation1 [shape = 'u32[72,128]{1,0:T(1,128)}', space=vmem, size = 0x9000, scoped, tag = 'internal scratch']
  #allocation2 [shape = 'f32[8,34]{1,0:T(8,128)}', space=vmem, size = 0x1000, scoped, tag = 'scratch operand']
  %s0 = inlined_call_operand.vmem [shape: f32[4,32], index: 0, kind: input, shape index: {}]
  %s1 = inlined_call_operand.vmem [shape: f32[2,8,4], index: 1, kind: input, shape index: {}]
  %s2 = inlined_call_operand.vmem [shape: f32[8,1], index: 2, kind: input, shape index: {}]
  %s3 = inlined_call_operand.vmem [shape: f32[2,8,8], index: 3, kind: input, shape index: {}]
  %s4 = inlined_call_operand.vmem [shape: f32[8,1], index: 4, kind: input, shape index: {}]
  %s5 = inlined_call_operand.vmem [shape: f32[8,4], index: 5, kind: input, shape index: {}]
  %s6 = inlined_call_operand.vmem [shape: f32[8,1], index: 6, kind: input, shape index: {}]
  %s7 = inlined_call_operand.vmem [shape: f32[2,8,8], index: 7, kind: input, shape index: {}]
  %s8 = inlined_call_operand.vmem [shape: f32[8,1], index: 8, kind: input, shape index: {}]
  %s9 = inlined_call_operand.vmem [shape: f32[2,8,8], index: 9, kind: input, shape index: {}]
  %s10 = inlined_call_operand.vmem [shape: f32[8,1], index: 10, kind: input, shape index: {}]
  %s11 = inlined_call_operand.hbm [shape: f32[8,32], index: 11, kind: output, shape index: {}]
  %s12 = sld [smem:[#allocation0]]
  $region54: #{tpu_custom_call.1} parent=0
    _
  %s14 = ssub.s32 1, %s12
  %s15 = scalar_select 0, %s14, %s12
  $region1: #{tpu_custom_call.1} parent=0
    #allocation3 [shape = 'u8[4096]{0}', space=vmem, size = 0x1000, scoped, tag = 'output window, operand 0, single buffered']
    #allocation4 [shape = 's32[1]{0}', space=sflag, size = 0x4, scoped, tag = 'scoped memory for tpu_custom_call.1']
    %16 = vsyncpa [#allocation4], 0
    // Predicated region
    $region2: #{tpu_custom_call.1} parent=1 // pred_check
      _
    $region3: #{tpu_custom_call.1} parent=1 // pred_check_branch
      %18 = sbr.rel (0) target = $region5
    $region4: #{tpu_custom_call.1} parent=1 // pred_region
      _
    $region5: #{tpu_custom_call.1} parent=1 // pred_fallthru
      _
    // Predicated region
    $region6: #{tpu_custom_call.1} parent=1 // pred_check
      _
    $region7: #{tpu_custom_call.1} parent=1 // pred_check_branch
      %20 = sbr.rel (0) target = $region9
    $region8: #{tpu_custom_call.1} parent=1 // pred_region
      _
    $region9: #{tpu_custom_call.1} parent=1 // pred_fallthru
      _
    // Predicated region
    $region10: #{tpu_custom_call.1} parent=1 // pred_check
      _
    $region11: #{tpu_custom_call.1} parent=1 // pred_check_branch
      %22 = sbr.rel (0) target = $region13
    $region12: #{tpu_custom_call.1} parent=1 // pred_region
      _
    $region13: #{tpu_custom_call.1} parent=1 // pred_fallthru
      _
    // Predicated region
    $region14: #{tpu_custom_call.1} parent=1 // pred_check
      _
    $region15: #{tpu_custom_call.1} parent=1 // pred_check_branch
      %24 = sbr.rel (0) target = $region17
    $region16: #{tpu_custom_call.1} parent=1 // pred_region
      _
    $region17: #{tpu_custom_call.1} parent=1 // pred_fallthru
      _
    // Predicated region
    $region18: #{tpu_custom_call.1} parent=1 // pred_check
      _
    $region19: #{tpu_custom_call.1} parent=1 // pred_check_branch
      %26 = sbr.rel (0) target = $region21
    $region20: #{tpu_custom_call.1} parent=1 // pred_region
      _
    $region21: #{tpu_custom_call.1} parent=1 // pred_fallthru
      _
    // Predicated region
    $region22: #{tpu_custom_call.1} parent=1 // pred_check
      _
    $region23: #{tpu_custom_call.1} parent=1 // pred_check_branch
      %28 = sbr.rel (0) target = $region25
    $region24: #{tpu_custom_call.1} parent=1 // pred_region
      _
    $region25: #{tpu_custom_call.1} parent=1 // pred_fallthru
      _
    // Predicated region
    $region26: #{tpu_custom_call.1} parent=1 // pred_check
      _
    $region27: #{tpu_custom_call.1} parent=1 // pred_check_branch
      %30 = sbr.rel (0) target = $region29
    $region28: #{tpu_custom_call.1} parent=1 // pred_region
      _
    $region29: #{tpu_custom_call.1} parent=1 // pred_fallthru
      _
    // Predicated region
    $region30: #{tpu_custom_call.1} parent=1 // pred_check
      _
    $region31: #{tpu_custom_call.1} parent=1 // pred_check_branch
      %32 = sbr.rel (0) target = $region33
    $region32: #{tpu_custom_call.1} parent=1 // pred_region
      _
    $region33: #{tpu_custom_call.1} parent=1 // pred_fallthru
      _
    // Predicated region
    $region34: #{tpu_custom_call.1} parent=1 // pred_check
      _
    $region35: #{tpu_custom_call.1} parent=1 // pred_check_branch
      %34 = sbr.rel (0) target = $region37
    $region36: #{tpu_custom_call.1} parent=1 // pred_region
      _
    $region37: #{tpu_custom_call.1} parent=1 // pred_fallthru
      _
    // Predicated region
    $region38: #{tpu_custom_call.1} parent=1 // pred_check
      _
    $region39: #{tpu_custom_call.1} parent=1 // pred_check_branch
      %36 = sbr.rel (0) target = $region41
    $region40: #{tpu_custom_call.1} parent=1 // pred_region
      _
    $region41: #{tpu_custom_call.1} parent=1 // pred_fallthru
      _
    // Predicated region
    $region42: #{tpu_custom_call.1} parent=1 // pred_check
      _
    $region43: #{tpu_custom_call.1} parent=1 // pred_check_branch
      %38 = sbr.rel (0) target = $region45
    $region44: #{tpu_custom_call.1} parent=1 // pred_region
      _
    $region45: #{tpu_custom_call.1} parent=1 // pred_fallthru
      _
    %vm39 = vcmask 15360
    %40 = vst.msk [vmem:[#allocation2] sm:$0xff] %vm39, 0.0
    %v41 = vlaneseq
    %v42 = vand.u32 %v41, 127
    %vm43 = vcmp.lt.s32.totalorder %v42, 0
    %v44 = vsub.s32 0, %v42
    %v45 = vsel %vm43, %v44, %v42
    %v46 = vshrl.u32 %v45, 4
    %v47 = vand.u32 %v45, 15
    %v48 = vsub.s32 0, %v47
    %v49 = vsel %vm43, %v48, %v47
    %vm50 = vcmp.ne.s32.totalorder %v49, 0
    %vm51 = vcmp.lt.s32.totalorder %v49, 0
    %vm52 = vmand %vm51, %vm50
    %v53 = vadd.s32 %v49, 16
    %v54 = vsel %vm52, %v53, %v49
    %v55 = vld [vmem:[%s0] sm:$0xf]
    %57 = vrot.lane.b32.xlu0 %v55, 2
    %v58 = vpop.permute.xlu0 %57
    %vm60 = vcmask 273424
    %61 = vst.msk [vmem:[#allocation2] sm:$0xf] %vm60, %v58
    %v62 = vld [vmem:[#allocation2] sm:$0xf]
    %vm63 = vcmp.ge.s32.totalorder %v54, 1
    %v64 = vsel %vm63, 1, 0
    %vm65 = vcmp.eq.s32.totalorder %v64, 1
    %67 = vrot.lane.b32.xlu0 %v62, 127
    %v68 = vpop.permute.xlu0 %67
    %v70 = vsel %vm65, %v68, 0.0
    %v71 = vld [vmem:[%s1] sm:$0xff]
    %s72 = scalar_lea.vmem %s1, 8
    %v73 = vld [vmem:[%s72] sm:$0xff]
    %74 = vrot.lane.b32.xlu0 %v62, 126
    %v75 = vpop.permute.xlu0 %74
    %vm76 = vcmask 31744
    %v78 = vsel %vm76, %v73, 0
    %vm80 = vcmask 1043456
    %v81 = vsel %vm80, %v75, 0
    %83 = vmatpush.msra.mxu0 0.0
    %84 = vmatpush.msra.mxu0 0.0
    %85 = vmatpush.msra.mxu0 0.0
    %86 = vmatpush.msra.mxu0 0.0
    %87 = vmatpush.msra.mxu0 0.0
    %88 = vmatpush.msra.mxu0 0.0
    %89 = vmatpush.msra.mxu0 0.0
    %90 = vmatpush.msra.mxu0 0.0
    %91 = vmatpush.msra.mxu0 0.0
    %92 = vmatpush.msra.mxu0 0.0
    %93 = vmatpush.msra.mxu0 0.0
    %94 = vmatpush.msra.mxu0 0.0
    %95 = vmatpush.msra.mxu0 0.0
    %96 = vmatpush.msra.mxu0 0.0
    %97 = vmatpush.msra.mxu0 0.0
    %98 = vmatpush.msra.mxu0 %v81
    %99 = vmatmul.f32.gmra.mxu0 %v78
    %v100 = vpop.f32.mrf.mxu0
    %v101 = vadd.f32 0.0, %v100
    %102 = vdwg.mxu0
    %v104 = vsel %vm76, %v71, 0
    %v107 = vsel %vm80, %v70, 0
    %109 = vmatpush.msra.mxu0 0.0
    %110 = vmatpush.msra.mxu0 0.0
    %111 = vmatpush.msra.mxu0 0.0
    %112 = vmatpush.msra.mxu0 0.0
    %113 = vmatpush.msra.mxu0 0.0
    %114 = vmatpush.msra.mxu0 0.0
    %115 = vmatpush.msra.mxu0 0.0
    %116 = vmatpush.msra.mxu0 0.0
    %117 = vmatpush.msra.mxu0 0.0
    %118 = vmatpush.msra.mxu0 0.0
    %119 = vmatpush.msra.mxu0 0.0
    %120 = vmatpush.msra.mxu0 0.0
    %121 = vmatpush.msra.mxu0 0.0
    %122 = vmatpush.msra.mxu0 0.0
    %123 = vmatpush.msra.mxu0 0.0
    %124 = vmatpush.msra.mxu0 %v107
    %125 = vmatmul.f32.gmra.mxu0 %v104
    %v126 = vpop.f32.mrf.mxu0
    %v127 = vadd.f32 %v101, %v126
    %128 = vdwg.mxu0
    %v129 = vld [vmem:[%s2] sm:$0xff]
    %131 = vset.pattern.permute.xlu0 0
    %132 = vperm.xlu0 %131, %v129
    %v133 = vpop.permute.xlu0 %132
    %v135 = vadd.f32 %v127, %v133
    %v136 = vmax.f32 %v135, 0.0
    %138 = vrot.lane.b32.xlu0 %v136, 2
    %v139 = vpop.permute.xlu0 %138
    %vm141 = vcmask 277520
    %142 = vst.msk [vmem:[#allocation2] sm:$0xff] %vm141, %v139
    %v143 = vld [vmem:[#allocation2] sm:$0xff]
    %145 = vrot.lane.b32.xlu0 %v143, 127
    %v146 = vpop.permute.xlu0 %145
    %v148 = vsel %vm65, %v146, 0.0
    %v149 = vld [vmem:[%s3] sm:$0xff]
    %s150 = scalar_lea.vmem %s3, 8
    %v151 = vld [vmem:[%s150] sm:$0xff]
    %152 = vrot.lane.b32.xlu0 %v143, 126
    %v153 = vpop.permute.xlu0 %152
    %vm155 = vcmask 64512
    %v157 = vsel %vm155, %v151, 0
    %159 = vmatpush.msra.mxu0 0.0
    %160 = vmatpush.msra.mxu0 0.0
    %161 = vmatpush.msra.mxu0 0.0
    %162 = vmatpush.msra.mxu0 0.0
    %163 = vmatpush.msra.mxu0 0.0
    %164 = vmatpush.msra.mxu0 0.0
    %165 = vmatpush.msra.mxu0 0.0
    %166 = vmatpush.msra.mxu0 0.0
    %167 = vmatpush.msra.mxu0 0.0
    %168 = vmatpush.msra.mxu0 0.0
    %169 = vmatpush.msra.mxu0 0.0
    %170 = vmatpush.msra.mxu0 0.0
    %171 = vmatpush.msra.mxu0 0.0
    %172 = vmatpush.msra.mxu0 0.0
    %173 = vmatpush.msra.mxu0 0.0
    %174 = vmatpush.msra.mxu0 %v153
    %175 = vmatmul.f32.gmra.mxu0 %v157
    %v176 = vpop.f32.mrf.mxu0
    %v177 = vadd.f32 0.0, %v176
    %178 = vdwg.mxu0
    %v180 = vsel %vm155, %v149, 0
    %182 = vmatpush.msra.mxu0 0.0
    %183 = vmatpush.msra.mxu0 0.0
    %184 = vmatpush.msra.mxu0 0.0
    %185 = vmatpush.msra.mxu0 0.0
    %186 = vmatpush.msra.mxu0 0.0
    %187 = vmatpush.msra.mxu0 0.0
    %188 = vmatpush.msra.mxu0 0.0
    %189 = vmatpush.msra.mxu0 0.0
    %190 = vmatpush.msra.mxu0 0.0
    %191 = vmatpush.msra.mxu0 0.0
    %192 = vmatpush.msra.mxu0 0.0
    %193 = vmatpush.msra.mxu0 0.0
    %194 = vmatpush.msra.mxu0 0.0
    %195 = vmatpush.msra.mxu0 0.0
    %196 = vmatpush.msra.mxu0 0.0
    %197 = vmatpush.msra.mxu0 %v148
    %198 = vmatmul.f32.gmra.mxu0 %v180
    %v199 = vpop.f32.mrf.mxu0
    %v200 = vadd.f32 %v177, %v199
    %201 = vdwg.mxu0
    %v202 = vld [vmem:[%s4] sm:$0xff]
    %204 = vset.pattern.permute.xlu0 0
    %205 = vperm.xlu0 %204, %v202
    %v206 = vpop.permute.xlu0 %205
    %v208 = vadd.f32 %v200, %v206
    %v209 = vmax.f32 %v208, 0.0
    %v210 = vld [vmem:[%s5] sm:$0xff]
    %v211 = vld [vmem:[%s6] sm:$0xff]
    %213 = vset.pattern.permute.xlu0 0
    %214 = vperm.xlu0 %213, %v211
    %v215 = vpop.permute.xlu0 %214
    %v218 = vsel %vm76, %v210, 0
    %v220 = vsel %vm80, %v55, 0
    %222 = vmatpush.msra.mxu0 0.0
    %223 = vmatpush.msra.mxu0 0.0
    %224 = vmatpush.msra.mxu0 0.0
    %225 = vmatpush.msra.mxu0 0.0
    %226 = vmatpush.msra.mxu0 0.0
    %227 = vmatpush.msra.mxu0 0.0
    %228 = vmatpush.msra.mxu0 0.0
    %229 = vmatpush.msra.mxu0 0.0
    %230 = vmatpush.msra.mxu0 0.0
    %231 = vmatpush.msra.mxu0 0.0
    %232 = vmatpush.msra.mxu0 0.0
    %233 = vmatpush.msra.mxu0 0.0
    %234 = vmatpush.msra.mxu0 0.0
    %235 = vmatpush.msra.mxu0 0.0
    %236 = vmatpush.msra.mxu0 0.0
    %237 = vmatpush.msra.mxu0 %v220
    %238 = vmatmul.f32.gmra.mxu0 %v218
    %v239 = vpop.f32.mrf.mxu0
    %v240 = vadd.f32 %v215, %v239
    %241 = vdwg.mxu0
    %v242 = vadd.f32 %v209, %v240
    %v243 = vmax.f32 %v242, 0.0
    %245 = vrot.lane.b32.xlu0 %v243, 2
    %v246 = vpop.permute.xlu0 %245
    %248 = vst.msk [vmem:[#allocation2] sm:$0xff] %vm141, %v246
    %v249 = vld [vmem:[#allocation2] sm:$0xff]
    %vm250 = vcmp.ge.s32.totalorder %v54, 2
    %v251 = vsel %vm250, 1, 0
    %vm252 = vcmp.eq.s32.totalorder %v251, 1
    %v253 = vsel %vm252, %v249, 0.0
    %v254 = vld [vmem:[%s7] sm:$0xff]
    %s255 = scalar_lea.vmem %s7, 8
    %v256 = vld [vmem:[%s255] sm:$0xff]
    %258 = vrot.lane.b32.xlu0 %v249, 126
    %v259 = vpop.permute.xlu0 %258
    %v262 = vsel %vm155, %v256, 0
    %264 = vmatpush.msra.mxu0 0.0
    %265 = vmatpush.msra.mxu0 0.0
    %266 = vmatpush.msra.mxu0 0.0
    %267 = vmatpush.msra.mxu0 0.0
    %268 = vmatpush.msra.mxu0 0.0
    %269 = vmatpush.msra.mxu0 0.0
    %270 = vmatpush.msra.mxu0 0.0
    %271 = vmatpush.msra.mxu0 0.0
    %272 = vmatpush.msra.mxu0 0.0
    %273 = vmatpush.msra.mxu0 0.0
    %274 = vmatpush.msra.mxu0 0.0
    %275 = vmatpush.msra.mxu0 0.0
    %276 = vmatpush.msra.mxu0 0.0
    %277 = vmatpush.msra.mxu0 0.0
    %278 = vmatpush.msra.mxu0 0.0
    %279 = vmatpush.msra.mxu0 %v259
    %280 = vmatmul.f32.gmra.mxu0 %v262
    %v281 = vpop.f32.mrf.mxu0
    %v282 = vadd.f32 0.0, %v281
    %283 = vdwg.mxu0
    %v285 = vsel %vm155, %v254, 0
    %287 = vmatpush.msra.mxu0 0.0
    %288 = vmatpush.msra.mxu0 0.0
    %289 = vmatpush.msra.mxu0 0.0
    %290 = vmatpush.msra.mxu0 0.0
    %291 = vmatpush.msra.mxu0 0.0
    %292 = vmatpush.msra.mxu0 0.0
    %293 = vmatpush.msra.mxu0 0.0
    %294 = vmatpush.msra.mxu0 0.0
    %295 = vmatpush.msra.mxu0 0.0
    %296 = vmatpush.msra.mxu0 0.0
    %297 = vmatpush.msra.mxu0 0.0
    %298 = vmatpush.msra.mxu0 0.0
    %299 = vmatpush.msra.mxu0 0.0
    %300 = vmatpush.msra.mxu0 0.0
    %301 = vmatpush.msra.mxu0 0.0
    %302 = vmatpush.msra.mxu0 %v253
    %303 = vmatmul.f32.gmra.mxu0 %v285
    %v304 = vpop.f32.mrf.mxu0
    %v305 = vadd.f32 %v282, %v304
    %306 = vdwg.mxu0
    %v307 = vld [vmem:[%s8] sm:$0xff]
    %309 = vset.pattern.permute.xlu0 0
    %310 = vperm.xlu0 %309, %v307
    %v311 = vpop.permute.xlu0 %310
    %v313 = vadd.f32 %v305, %v311
    %v314 = vmax.f32 %v313, 0.0
    %316 = vrot.lane.b32.xlu0 %v314, 2
    %v317 = vpop.permute.xlu0 %316
    %319 = vst.msk [vmem:[#allocation2] sm:$0xff] %vm141, %v317
    %v320 = vld [vmem:[#allocation2] sm:$0xff]
    %v321 = vsel %vm252, %v320, 0.0
    %v322 = vld [vmem:[%s9] sm:$0xff]
    %s323 = scalar_lea.vmem %s9, 8
    %v324 = vld [vmem:[%s323] sm:$0xff]
    %326 = vrot.lane.b32.xlu0 %v320, 126
    %v327 = vpop.permute.xlu0 %326
    %v330 = vsel %vm155, %v324, 0
    %332 = vmatpush.msra.mxu0 0.0
    %333 = vmatpush.msra.mxu0 0.0
    %334 = vmatpush.msra.mxu0 0.0
    %335 = vmatpush.msra.mxu0 0.0
    %336 = vmatpush.msra.mxu0 0.0
    %337 = vmatpush.msra.mxu0 0.0
    %338 = vmatpush.msra.mxu0 0.0
    %339 = vmatpush.msra.mxu0 0.0
    %340 = vmatpush.msra.mxu0 0.0
    %341 = vmatpush.msra.mxu0 0.0
    %342 = vmatpush.msra.mxu0 0.0
    %343 = vmatpush.msra.mxu0 0.0
    %344 = vmatpush.msra.mxu0 0.0
    %345 = vmatpush.msra.mxu0 0.0
    %346 = vmatpush.msra.mxu0 0.0
    %347 = vmatpush.msra.mxu0 %v327
    %348 = vmatmul.f32.gmra.mxu0 %v330
    %v349 = vpop.f32.mrf.mxu0
    %v350 = vadd.f32 0.0, %v349
    %351 = vdwg.mxu0
    %v353 = vsel %vm155, %v322, 0
    %355 = vmatpush.msra.mxu0 0.0
    %356 = vmatpush.msra.mxu0 0.0
    %357 = vmatpush.msra.mxu0 0.0
    %358 = vmatpush.msra.mxu0 0.0
    %359 = vmatpush.msra.mxu0 0.0
    %360 = vmatpush.msra.mxu0 0.0
    %361 = vmatpush.msra.mxu0 0.0
    %362 = vmatpush.msra.mxu0 0.0
    %363 = vmatpush.msra.mxu0 0.0
    %364 = vmatpush.msra.mxu0 0.0
    %365 = vmatpush.msra.mxu0 0.0
    %366 = vmatpush.msra.mxu0 0.0
    %367 = vmatpush.msra.mxu0 0.0
    %368 = vmatpush.msra.mxu0 0.0
    %369 = vmatpush.msra.mxu0 0.0
    %370 = vmatpush.msra.mxu0 %v321
    %371 = vmatmul.f32.gmra.mxu0 %v353
    %v372 = vpop.f32.mrf.mxu0
    %v373 = vadd.f32 %v350, %v372
    %374 = vdwg.mxu0
    %v375 = vld [vmem:[%s10] sm:$0xff]
    %377 = vset.pattern.permute.xlu0 0
    %378 = vperm.xlu0 %377, %v375
    %v379 = vpop.permute.xlu0 %378
    %v381 = vadd.f32 %v373, %v379
    %v382 = vmax.f32 %v381, 0.0
    %v383 = vadd.f32 %v382, %v243
    %v384 = vmax.f32 %v383, 0.0
    %vm385 = vcmask 261120
    %386 = vst.msk [vmem:[#allocation3] sm:$0xff] %vm385, %v384
    // Predicated region
    $region46: #{tpu_custom_call.1} parent=1 // pred_check
      _
    $region47: #{tpu_custom_call.1} parent=1 // pred_check_branch
      %388 = sbr.rel (0) target = $region49
    $region48: #{tpu_custom_call.1} parent=1 // pred_region
      %390 = vsyncadd [#allocation4], 0
      %s392 = sshll.u32 [#allocation3], 4
      %s393 = int_to_ptr.vmem [resolvable:$true] %s392
      %s394 = sshll.u32 %s11, 4
      %s395 = int_to_ptr.hbm [resolvable:$true] %s394
      %397 = dma.vmem_to_hbm [thread:$0]  %s393, 128, %s395, [#allocation4]
    $region49: #{tpu_custom_call.1} parent=1 // pred_fallthru
      _
    // Predicated region
    $region50: #{tpu_custom_call.1} parent=1 // pred_check
      _
    $region51: #{tpu_custom_call.1} parent=1 // pred_check_branch
      %399 = sbr.rel (0) target = $region53
    $region52: #{tpu_custom_call.1} parent=1 // pred_region
      %401 = dma.done [#allocation4], 128
    $region53: #{tpu_custom_call.1} parent=1 // pred_fallthru
      _
    %402 = vsyncpa [#allocation4], 1

</llo_original>
